<compile_context>
chip_gen: v6e
topology: v6e:2x2x1
jax: 0.10.0
libtpu: 0.0.40
codegen_flags: <defaults>
</compile_context>

<pallas_src>
import jax
import jax.numpy as jnp
from jax.experimental import pallas as pl
from jax.experimental.pallas import tpu as pltpu

LANE = 128


def prediction_kernel(p_ref, h_ref, w1_ref, b1_ref, w2_ref, b2_ref, o_ref):
    # p_ref / h_ref: (block_b, L, D) in native layout.
    p = p_ref[...].astype(jnp.float32)
    h = h_ref[...].astype(jnp.float32)
    inv_lp = 1.0 / p.shape[1]
    inv_lh = 1.0 / h.shape[1]

    # Pool over the sequence axis (axis=1).
    vp_avg = jnp.sum(p, axis=1) * inv_lp          # (block_b, D)
    vp_max = jnp.max(p, axis=1)                   # (block_b, D)
    vh_avg = jnp.sum(h, axis=1) * inv_lh          # (block_b, D)
    vh_max = jnp.max(h, axis=1)                   # (block_b, D)

    # Split-K accumulation == concat([vp_avg, vp_max, vh_avg, vh_max]) @ W1,
    # with w1_ref shaped (4, D, len_mid). Avoids the lane-axis concatenate.
    acc = jnp.dot(vp_avg, w1_ref[0], preferred_element_type=jnp.float32)
    acc += jnp.dot(vp_max, w1_ref[1], preferred_element_type=jnp.float32)
    acc += jnp.dot(vh_avg, w1_ref[2], preferred_element_type=jnp.float32)
    acc += jnp.dot(vh_max, w1_ref[3], preferred_element_type=jnp.float32)

    hid = jnp.tanh(acc + b1_ref[...])                                  # (block_b, len_mid)
    out = jnp.dot(hid, w2_ref[...], preferred_element_type=jnp.float32) + b2_ref[...]
    o_ref[...] = out.astype(o_ref.dtype)          # lane-dense (block_b, 128*k) store


def _round_up(x, m):
    return ((x + m - 1) // m) * m


def _vmem_limit_bytes():
    """Per-generation scoped-VMEM limit: ~3/4 of physical, capped at 96 MiB."""
    phys = 64 * 1024 * 1024                       # conservative fallback (v7x)
    try:
        info = pltpu.get_tpu_info()
        phys = int(getattr(info, "vmem_capacity_bytes", phys))
    except Exception:
        pass
    limit = min(phys * 3 // 4, 96 * 1024 * 1024)  # v7x -> 48 MiB, v5e/v6e -> 96 MiB
    return max(limit, 32 * 1024 * 1024)


def _choose_block_b(B, Lp, Lh, D, n_pad, bytes_per_elem, vmem_limit, weight_bytes):
    """Batch-tile size from a VMEM budget (double-buffered in + out tiles)."""
    row_bytes = 2 * (Lp + Lh) * D * bytes_per_elem + 2 * n_pad * 4
    budget = int(vmem_limit * 0.85) - weight_bytes - (1 << 20)
    max_rows = max((budget // max(row_bytes, 1)) // 8 * 8, 8)
    max_rows = min(max_rows, 1024)                # amortize ~0.35us/step; keep pipelining

    if B <= max_rows:
        if B < 16:
            return B                              # single tile; block == full dim is legal
        # Split into >= 2 tiles so v7x's two TensorCores both get work.
        return min(_round_up(pl.cdiv(B, 2), 8), max_rows)
    return max_rows


def prediction_forward(p, h, w1, b1, w2, b2, *, block_b=None):
    B, Lp, D = p.shape
    Bh, Lh, Dh = h.shape
    assert Bh == B and Dh == D
    len_v, len_mid = w1.shape
    assert len_v == 4 * D
    type_num = w2.shape[1]

    # Lane-pad the classifier head so the output store is full-lane.
    n_pad = max(_round_up(type_num, LANE), LANE)
    w2p = jnp.pad(w2, ((0, 0), (0, n_pad - type_num)))
    b2p = jnp.pad(b2.reshape(1, -1), ((0, 0), (0, n_pad - type_num)))
    b1r = b1.reshape(1, len_mid)
    w1r = w1.reshape(4, D, len_mid)

    vmem_limit = _vmem_limit_bytes()
    weight_bytes = 4 * (w1r.size + b1r.size + w2p.size + b2p.size)
    if block_b is None:
        block_b = _choose_block_b(B, Lp, Lh, D, n_pad, p.dtype.itemsize,
                                  vmem_limit, weight_bytes)
    grid = (pl.cdiv(B, block_b),)

    flops = 2 * B * (len_v * len_mid + len_mid * n_pad) + 2 * B * D * (Lp + Lh)
    bytes_accessed = (p.size * p.dtype.itemsize + h.size * h.dtype.itemsize
                      + weight_bytes + 4 * B * n_pad)
    cost = pl.CostEstimate(
        flops=flops, transcendentals=B * len_mid, bytes_accessed=bytes_accessed)

    out_padded = pl.pallas_call(
        prediction_kernel,
        out_shape=jax.ShapeDtypeStruct((B, n_pad), jnp.float32),
        grid=grid,
        in_specs=[
            pl.BlockSpec((block_b, Lp, D), lambda i: (i, 0, 0)),   # native layout, contiguous DMA
            pl.BlockSpec((block_b, Lh, D), lambda i: (i, 0, 0)),
            pl.BlockSpec(w1r.shape, lambda i: (0, 0, 0)),
            pl.BlockSpec(b1r.shape, lambda i: (0, 0)),
            pl.BlockSpec(w2p.shape, lambda i: (0, 0)),
            pl.BlockSpec(b2p.shape, lambda i: (0, 0)),
        ],
        out_specs=pl.BlockSpec((block_b, n_pad), lambda i: (i, 0)),
        compiler_params=pltpu.CompilerParams(
            dimension_semantics=("parallel",),    # batch tiles shard across TCs (v7x)
            vmem_limit_bytes=vmem_limit,
        ),
        cost_estimate=cost,
    )(p, h, w1r, b1r, w2p, b2p)

    return out_padded[:, :type_num]


def make_params(key, len_v, len_mid, type_num):
    k1, k2, k3, k4 = jax.random.split(key, 4)
    lim1 = 1.0 / jnp.sqrt(len_v)
    lim2 = 1.0 / jnp.sqrt(len_mid)
    # Stored transposed vs PyTorch: (in_features, out_features).
    w1 = jax.random.uniform(k1, (len_v, len_mid), jnp.float32, -lim1, lim1)
    b1 = jax.random.uniform(k2, (1, len_mid), jnp.float32, -lim1, lim1)
    w2 = jax.random.uniform(k3, (len_mid, type_num), jnp.float32, -lim2, lim2)
    b2 = jax.random.uniform(k4, (1, type_num), jnp.float32, -lim2, lim2)
    return w1, b1, w2, b2


def reference_forward(p, h, w1, b1, w2, b2):
    vp_avg = p.sum(1) / p.shape[1]
    vp_max = p.max(1)
    vh_avg = h.sum(1) / h.shape[1]
    vh_max = h.max(1)
    feat = jnp.concatenate([vp_avg, vp_max, vh_avg, vh_max], axis=-1)
    hid = jnp.tanh(feat @ w1 + b1)
    return hid @ w2 + b2


if __name__ == "__main__":
    # B=2, seq=8, feature D=32 => len_v = 4*D = 128, len_mid = 32, type_num = 4.
    B, L, D = 2, 8, 32
    len_v, len_mid, type_num = 4 * D, 32, 4

    key = jax.random.PRNGKey(0)
    kp, kh, kparam = jax.random.split(key, 3)
    p = jax.random.normal(kp, (B, L, D), jnp.float32)
    h = jax.random.normal(kh, (B, L, D), jnp.float32)
    w1, b1, w2, b2 = make_params(kparam, len_v, len_mid, type_num)

    out = prediction_forward(p, h, w1, b1, w2, b2)
    out = jax.block_until_ready(out)

    ref = reference_forward(p, h, w1, b1, w2, b2)
    assert out.shape == (B, type_num)
    assert jnp.allclose(out, ref, atol=1e-4, rtol=1e-5), "mismatch vs reference"

    print("KERNEL_OK")
</pallas_src>

<mosaic_0001>
module attributes {stable_mosaic.version = 11 : i64} {
  func.func @prediction_kernel(%arg0: i32, %arg1: memref<2x8x32xf32, #tpu.memory_space<vmem>>, %arg2: memref<2x8x32xf32, #tpu.memory_space<vmem>>, %arg3: memref<4x32x32xf32, #tpu.memory_space<vmem>>, %arg4: memref<1x32xf32, #tpu.memory_space<vmem>>, %arg5: memref<32x128xf32, #tpu.memory_space<vmem>>, %arg6: memref<1x128xf32, #tpu.memory_space<vmem>>, %arg7: memref<2x128xf32, #tpu.memory_space<vmem>>) attributes {dimension_semantics = [#tpu.dimension_semantics<parallel>], iteration_bounds = array<i64: 1>, scalar_prefetch = 0 : i64, scratch_operands = 0 : i64, tpu.core_type = #tpu.core_type<tc>, window_params = [{transform_indices = @transform_0, window_bounds = array<i64: 2, 8, 32>}, {transform_indices = @transform_1, window_bounds = array<i64: 2, 8, 32>}, {pipeline_mode = #tpu.pipeline_mode<synchronous>, transform_indices = @transform_2, window_bounds = array<i64: 4, 32, 32>}, {pipeline_mode = #tpu.pipeline_mode<synchronous>, transform_indices = @transform_3, window_bounds = array<i64: 1, 32>}, {pipeline_mode = #tpu.pipeline_mode<synchronous>, transform_indices = @transform_4, window_bounds = array<i64: 32, 128>}, {pipeline_mode = #tpu.pipeline_mode<synchronous>, transform_indices = @transform_5, window_bounds = array<i64: 1, 128>}, {transform_indices = @transform_6, window_bounds = array<i64: 2, 128>}]} {
    %c0 = arith.constant 0 : index
    %c0_0 = arith.constant 0 : index
    %c0_1 = arith.constant 0 : index
    %0 = vector.load %arg1[%c0, %c0_0, %c0_1] : memref<2x8x32xf32, #tpu.memory_space<vmem>>, vector<2x8x32xf32>
    %c0_2 = arith.constant 0 : index
    %c0_3 = arith.constant 0 : index
    %c0_4 = arith.constant 0 : index
    %1 = vector.load %arg2[%c0_2, %c0_3, %c0_4] : memref<2x8x32xf32, #tpu.memory_space<vmem>>, vector<2x8x32xf32>
    %cst = arith.constant dense<0.000000e+00> : vector<2x32xf32>
    %2 = vector.multi_reduction <add>, %0, %cst [1] : vector<2x8x32xf32> to vector<2x32xf32>
    %cst_5 = arith.constant 1.250000e-01 : f32
    %3 = vector.broadcast %cst_5 : f32 to vector<2x32xf32>
    %4 = arith.mulf %2, %3 : vector<2x32xf32>
    %cst_6 = arith.constant dense<0xFF800000> : vector<2x32xf32>
    %5 = vector.multi_reduction <maximumf>, %0, %cst_6 [1] : vector<2x8x32xf32> to vector<2x32xf32>
    %cst_7 = arith.constant dense<0.000000e+00> : vector<2x32xf32>
    %6 = vector.multi_reduction <add>, %1, %cst_7 [1] : vector<2x8x32xf32> to vector<2x32xf32>
    %cst_8 = arith.constant 1.250000e-01 : f32
    %7 = vector.broadcast %cst_8 : f32 to vector<2x32xf32>
    %8 = arith.mulf %6, %7 : vector<2x32xf32>
    %cst_9 = arith.constant dense<0xFF800000> : vector<2x32xf32>
    %9 = vector.multi_reduction <maximumf>, %1, %cst_9 [1] : vector<2x8x32xf32> to vector<2x32xf32>
    %c0_10 = arith.constant 0 : index
    %c0_11 = arith.constant 0 : index
    %c0_12 = arith.constant 0 : index
    %10 = vector.load %arg3[%c0_10, %c0_11, %c0_12] : memref<4x32x32xf32, #tpu.memory_space<vmem>>, vector<1x32x32xf32>
    %11 = vector.shape_cast %10 : vector<1x32x32xf32> to vector<32x32xf32>
    %cst_13 = arith.constant dense<0.000000e+00> : vector<2x32xf32>
    %12 = tpu.matmul %4, %11, %cst_13 {dimension_numbers = #tpu.dot_dimension_numbers<[1], [0], [0], [1], [0, 0, 1, 1], [], []>} : vector<2x32xf32>, vector<32x32xf32>, vector<2x32xf32> -> vector<2x32xf32>
    %c1 = arith.constant 1 : index
    %c0_14 = arith.constant 0 : index
    %c0_15 = arith.constant 0 : index
    %13 = vector.load %arg3[%c1, %c0_14, %c0_15] : memref<4x32x32xf32, #tpu.memory_space<vmem>>, vector<1x32x32xf32>
    %14 = vector.shape_cast %13 : vector<1x32x32xf32> to vector<32x32xf32>
    %cst_16 = arith.constant dense<0.000000e+00> : vector<2x32xf32>
    %15 = tpu.matmul %5, %14, %cst_16 {dimension_numbers = #tpu.dot_dimension_numbers<[1], [0], [0], [1], [0, 0, 1, 1], [], []>} : vector<2x32xf32>, vector<32x32xf32>, vector<2x32xf32> -> vector<2x32xf32>
    %16 = arith.addf %12, %15 : vector<2x32xf32>
    %c2 = arith.constant 2 : index
    %c0_17 = arith.constant 0 : index
    %c0_18 = arith.constant 0 : index
    %17 = vector.load %arg3[%c2, %c0_17, %c0_18] : memref<4x32x32xf32, #tpu.memory_space<vmem>>, vector<1x32x32xf32>
    %18 = vector.shape_cast %17 : vector<1x32x32xf32> to vector<32x32xf32>
    %cst_19 = arith.constant dense<0.000000e+00> : vector<2x32xf32>
    %19 = tpu.matmul %8, %18, %cst_19 {dimension_numbers = #tpu.dot_dimension_numbers<[1], [0], [0], [1], [0, 0, 1, 1], [], []>} : vector<2x32xf32>, vector<32x32xf32>, vector<2x32xf32> -> vector<2x32xf32>
    %20 = arith.addf %16, %19 : vector<2x32xf32>
    %c3 = arith.constant 3 : index
    %c0_20 = arith.constant 0 : index
    %c0_21 = arith.constant 0 : index
    %21 = vector.load %arg3[%c3, %c0_20, %c0_21] : memref<4x32x32xf32, #tpu.memory_space<vmem>>, vector<1x32x32xf32>
    %22 = vector.shape_cast %21 : vector<1x32x32xf32> to vector<32x32xf32>
    %cst_22 = arith.constant dense<0.000000e+00> : vector<2x32xf32>
    %23 = tpu.matmul %9, %22, %cst_22 {dimension_numbers = #tpu.dot_dimension_numbers<[1], [0], [0], [1], [0, 0, 1, 1], [], []>} : vector<2x32xf32>, vector<32x32xf32>, vector<2x32xf32> -> vector<2x32xf32>
    %24 = arith.addf %20, %23 : vector<2x32xf32>
    %c0_23 = arith.constant 0 : index
    %c0_24 = arith.constant 0 : index
    %25 = vector.load %arg4[%c0_23, %c0_24] : memref<1x32xf32, #tpu.memory_space<vmem>>, vector<1x32xf32>
    %26 = vector.broadcast %25 : vector<1x32xf32> to vector<2x32xf32>
    %27 = arith.addf %24, %26 : vector<2x32xf32>
    %28 = math.tanh %27 : vector<2x32xf32>
    %c0_25 = arith.constant 0 : index
    %c0_26 = arith.constant 0 : index
    %29 = vector.load %arg5[%c0_25, %c0_26] : memref<32x128xf32, #tpu.memory_space<vmem>>, vector<32x128xf32>
    %cst_27 = arith.constant dense<0.000000e+00> : vector<2x128xf32>
    %30 = tpu.matmul %28, %29, %cst_27 {dimension_numbers = #tpu.dot_dimension_numbers<[1], [0], [0], [1], [0, 0, 1, 1], [], []>} : vector<2x32xf32>, vector<32x128xf32>, vector<2x128xf32> -> vector<2x128xf32>
    %c0_28 = arith.constant 0 : index
    %c0_29 = arith.constant 0 : index
    %31 = vector.load %arg6[%c0_28, %c0_29] : memref<1x128xf32, #tpu.memory_space<vmem>>, vector<1x128xf32>
    %32 = vector.broadcast %31 : vector<1x128xf32> to vector<2x128xf32>
    %33 = arith.addf %30, %32 : vector<2x128xf32>
    %c0_30 = arith.constant 0 : index
    %c0_31 = arith.constant 0 : index
    %34 = vector.load %arg7[%c0_30, %c0_31] : memref<2x128xf32, #tpu.memory_space<vmem>>, vector<2x128xf32>
    tpu.vector_store %arg7[%c0_30, %c0_31], %33 {strides = array<i32>} : memref<2x128xf32, #tpu.memory_space<vmem>>, vector<2x128xf32>,
    return
  }
  func.func @transform_0(%arg0: i32) -> (i32, i32, i32) {
    %c0_i32 = arith.constant 0 : i32
    %c0_i32_0 = arith.constant 0 : i32
    %c0_i32_1 = arith.constant 0 : i32
    return %arg0, %c0_i32, %c0_i32_0 : i32, i32, i32
  }
  func.func @transform_1(%arg0: i32) -> (i32, i32, i32) {
    %c0_i32 = arith.constant 0 : i32
    %c0_i32_0 = arith.constant 0 : i32
    %c0_i32_1 = arith.constant 0 : i32
    return %arg0, %c0_i32, %c0_i32_0 : i32, i32, i32
  }
  func.func @transform_2(%arg0: i32) -> (i32, i32, i32) {
    %c0_i32 = arith.constant 0 : i32
    %c0_i32_0 = arith.constant 0 : i32
    %c0_i32_1 = arith.constant 0 : i32
    %c0_i32_2 = arith.constant 0 : i32
    return %c0_i32, %c0_i32_0, %c0_i32_1 : i32, i32, i32
  }
  func.func @transform_3(%arg0: i32) -> (i32, i32) {
    %c0_i32 = arith.constant 0 : i32
    %c0_i32_0 = arith.constant 0 : i32
    %c0_i32_1 = arith.constant 0 : i32
    return %c0_i32, %c0_i32_0 : i32, i32
  }
  func.func @transform_4(%arg0: i32) -> (i32, i32) {
    %c0_i32 = arith.constant 0 : i32
    %c0_i32_0 = arith.constant 0 : i32
    %c0_i32_1 = arith.constant 0 : i32
    return %c0_i32, %c0_i32_0 : i32, i32
  }
  func.func @transform_5(%arg0: i32) -> (i32, i32) {
    %c0_i32 = arith.constant 0 : i32
    %c0_i32_0 = arith.constant 0 : i32
    %c0_i32_1 = arith.constant 0 : i32
    return %c0_i32, %c0_i32_0 : i32, i32
  }
  func.func @transform_6(%arg0: i32) -> (i32, i32) {
    %c0_i32 = arith.constant 0 : i32
    %c0_i32_0 = arith.constant 0 : i32
    return %arg0, %c0_i32 : i32, i32
  }
}

</mosaic_0001>

<llo_original>
// kernel: tpu_custom_call.1
$region0: #{tpu_custom_call.1}
  #allocation0 [shape = 'u32[]', space=smem, size = 0x4, offset = 0x4, fixed_abs, tag = 'smem constant byte address 0x4 - core index']
  #allocation1 [shape = 'u32[144,128]{1,0:T(1,128)}', space=vmem, size = 0x12000, scoped, tag = 'internal scratch']
  %s0 = inlined_call_operand.hbm [shape: f32[2,8,32], index: 0, kind: input, shape index: {}]
  %s1 = inlined_call_operand.hbm [shape: f32[2,8,32], index: 1, kind: input, shape index: {}]
  %s2 = inlined_call_operand.hbm [shape: f32[4,32,32], index: 2, kind: input, shape index: {}]
  %s3 = inlined_call_operand.vmem [shape: f32[1,32], index: 3, kind: input, shape index: {}]
  %s4 = inlined_call_operand.hbm [shape: f32[32,128], index: 4, kind: input, shape index: {}]
  %s5 = inlined_call_operand.vmem [shape: f32[1,128], index: 5, kind: input, shape index: {}]
  %s6 = inlined_call_operand.hbm [shape: f32[2,128], index: 6, kind: output, shape index: {}]
  %s7 = sld [smem:[#allocation0]]
  $region50: #{tpu_custom_call.1} parent=0
    _
  %s9 = ssub.s32 1, %s7
  %s10 = scalar_select 0, %s9, %s7
  $region1: #{tpu_custom_call.1} parent=0
    #allocation2 [shape = 'u8[8192]{0}', space=vmem, size = 0x2000, scoped, tag = 'input window, operand 0, single buffered']
    #allocation3 [shape = 's32[1]{0}', space=sflag, size = 0x4, scoped, tag = 'scoped memory for tpu_custom_call.1']
    #allocation4 [shape = 's32[1]{0}', space=sflag, size = 0x4, scoped, tag = 'scoped memory for tpu_custom_call.1']
    #allocation5 [shape = 'u8[8192]{0}', space=vmem, size = 0x2000, scoped, tag = 'input window, operand 1, single buffered']
    #allocation6 [shape = 's32[1]{0}', space=sflag, size = 0x4, scoped, tag = 'scoped memory for tpu_custom_call.1']
    #allocation7 [shape = 'u8[65536]{0}', space=vmem, size = 0x10000, scoped, tag = 'input window, operand 2, single buffered']
    #allocation8 [shape = 'u8[16384]{0}', space=vmem, size = 0x4000, scoped, tag = 'input window, operand 4, single buffered']
    #allocation9 [shape = 's32[1]{0}', space=sflag, size = 0x4, scoped, tag = 'scoped memory for tpu_custom_call.1']
    #allocation10 [shape = 'u8[1024]{0}', space=vmem, size = 0x400, scoped, tag = 'output window, operand 0, single buffered']
    %11 = vsyncpa [#allocation3], 0
    %12 = vsyncpa [#allocation6], 0
    %13 = vsyncpa [#allocation9], 0
    %14 = vsyncpa [#allocation4], 0
    // Predicated region
    $region2: #{tpu_custom_call.1} parent=1 // pred_check
      _
    $region3: #{tpu_custom_call.1} parent=1 // pred_check_branch
      %16 = sbr.rel (0) target = $region5
    $region4: #{tpu_custom_call.1} parent=1 // pred_region
      %s18 = ssub.s32 256, 256
      %19 = vsyncadd [#allocation3], %s18
      %s20 = sshll.u32 [#allocation2], 4
      %s21 = int_to_ptr.vmem [resolvable:$true] %s20
      %26 = dma.hbm_to_vmem [thread:$0]  %s0, 256, %s21, [#allocation3], 128, 128, 8
    $region5: #{tpu_custom_call.1} parent=1 // pred_fallthru
      _
    // Predicated region
    $region6: #{tpu_custom_call.1} parent=1 // pred_check
      _
    $region7: #{tpu_custom_call.1} parent=1 // pred_check_branch
      %28 = sbr.rel (0) target = $region9
    $region8: #{tpu_custom_call.1} parent=1 // pred_region
      %s30 = ssub.s32 256, 256
      %31 = vsyncadd [#allocation6], %s30
      %s32 = sshll.u32 [#allocation5], 4
      %s33 = int_to_ptr.vmem [resolvable:$true] %s32
      %38 = dma.hbm_to_vmem [thread:$0]  %s1, 256, %s33, [#allocation6], 128, 128, 8
    $region9: #{tpu_custom_call.1} parent=1 // pred_fallthru
      _
    // Predicated region
    $region10: #{tpu_custom_call.1} parent=1 // pred_check
      _
    $region11: #{tpu_custom_call.1} parent=1 // pred_check_branch
      %40 = sbr.rel (0) target = $region13
    $region12: #{tpu_custom_call.1} parent=1 // pred_region
      %s42 = ssub.s32 2048, 2048
      %43 = vsyncadd [#allocation6], %s42
      %s44 = sshll.u32 [#allocation7], 4
      %s45 = int_to_ptr.vmem [resolvable:$true] %s44
      %50 = dma.hbm_to_vmem [thread:$0]  %s2, 2048, %s45, [#allocation6], 128, 128, 8
    $region13: #{tpu_custom_call.1} parent=1 // pred_fallthru
      _
    // Predicated region
    $region14: #{tpu_custom_call.1} parent=1 // pred_check
      _
    $region15: #{tpu_custom_call.1} parent=1 // pred_check_branch
      %52 = sbr.rel (0) target = $region17
    $region16: #{tpu_custom_call.1} parent=1 // pred_region
      _
    $region17: #{tpu_custom_call.1} parent=1 // pred_fallthru
      _
    // Predicated region
    $region18: #{tpu_custom_call.1} parent=1 // pred_check
      _
    $region19: #{tpu_custom_call.1} parent=1 // pred_check_branch
      %54 = sbr.rel (0) target = $region21
    $region20: #{tpu_custom_call.1} parent=1 // pred_region
      %s56 = ssub.s32 512, 512
      %57 = vsyncadd [#allocation9], %s56
      %s58 = sshll.u32 [#allocation8], 4
      %s59 = int_to_ptr.vmem [resolvable:$true] %s58
      %64 = dma.hbm_to_vmem [thread:$0]  %s4, 512, %s59, [#allocation9], 128, 128, 8
    $region21: #{tpu_custom_call.1} parent=1 // pred_fallthru
      _
    // Predicated region
    $region22: #{tpu_custom_call.1} parent=1 // pred_check
      _
    $region23: #{tpu_custom_call.1} parent=1 // pred_check_branch
      %66 = sbr.rel (0) target = $region25
    $region24: #{tpu_custom_call.1} parent=1 // pred_region
      _
    $region25: #{tpu_custom_call.1} parent=1 // pred_fallthru
      _
    // Predicated region
    $region26: #{tpu_custom_call.1} parent=1 // pred_check
      _
    $region27: #{tpu_custom_call.1} parent=1 // pred_check_branch
      %68 = sbr.rel (0) target = $region29
    $region28: #{tpu_custom_call.1} parent=1 // pred_region
      %69 = dma.done [#allocation3], 256
    $region29: #{tpu_custom_call.1} parent=1 // pred_fallthru
      _
    // Predicated region
    $region30: #{tpu_custom_call.1} parent=1 // pred_check
      _
    $region31: #{tpu_custom_call.1} parent=1 // pred_check_branch
      %71 = sbr.rel (0) target = $region33
    $region32: #{tpu_custom_call.1} parent=1 // pred_region
      %72 = dma.done [#allocation6], 256
    $region33: #{tpu_custom_call.1} parent=1 // pred_fallthru
      _
    // Predicated region
    $region34: #{tpu_custom_call.1} parent=1 // pred_check
      _
    $region35: #{tpu_custom_call.1} parent=1 // pred_check_branch
      %74 = sbr.rel (0) target = $region37
    $region36: #{tpu_custom_call.1} parent=1 // pred_region
      %75 = dma.done [#allocation6], 2048
    $region37: #{tpu_custom_call.1} parent=1 // pred_fallthru
      _
    // Predicated region
    $region38: #{tpu_custom_call.1} parent=1 // pred_check
      _
    $region39: #{tpu_custom_call.1} parent=1 // pred_check_branch
      %77 = sbr.rel (0) target = $region41
    $region40: #{tpu_custom_call.1} parent=1 // pred_region
      %78 = dma.done [#allocation9], 512
    $region41: #{tpu_custom_call.1} parent=1 // pred_fallthru
      _
    %v79 = vld [vmem:[#allocation2] sm:$0xff]
    %v80 = vld [vmem:[#allocation2 + $0x8] sm:$0xff]
    %v81 = vld [vmem:[#allocation5] sm:$0xff]
    %v82 = vld [vmem:[#allocation5 + $0x8] sm:$0xff]
    %vm83 = vcmask 261120
    %v84 = vsel %vm83, %v79, 0.0
    %v85 = vrot.slane %v84, 4
    %v86 = vadd.f32 %v84, %v85
    %v87 = vrot.slane %v86, 2
    %v88 = vadd.f32 %v86, %v87
    %v89 = vrot.slane %v88, 1
    %v90 = vadd.f32 %v88, %v89
    %v91 = vsel %vm83, %v80, 0.0
    %v92 = vrot.slane %v91, 4
    %v93 = vadd.f32 %v91, %v92
    %v94 = vrot.slane %v93, 2
    %v95 = vadd.f32 %v93, %v94
    %v96 = vrot.slane %v95, 1
    %v97 = vadd.f32 %v95, %v96
    %v98 = vmul.f32 %v90, 0.125
    %v99 = vmul.f32 %v97, 0.125
    %v100 = vsel %vm83, %v79, -inf
    %v101 = vrot.slane %v100, 4
    %v102 = vmax.f32 %v100, %v101
    %v103 = vrot.slane %v102, 2
    %v104 = vmax.f32 %v102, %v103
    %v105 = vrot.slane %v104, 1
    %v106 = vmax.f32 %v104, %v105
    %v107 = vsel %vm83, %v80, -inf
    %v108 = vrot.slane %v107, 4
    %v109 = vmax.f32 %v107, %v108
    %v110 = vrot.slane %v109, 2
    %v111 = vmax.f32 %v109, %v110
    %v112 = vrot.slane %v111, 1
    %v113 = vmax.f32 %v111, %v112
    %v114 = vsel %vm83, %v81, 0.0
    %v115 = vrot.slane %v114, 4
    %v116 = vadd.f32 %v114, %v115
    %v117 = vrot.slane %v116, 2
    %v118 = vadd.f32 %v116, %v117
    %v119 = vrot.slane %v118, 1
    %v120 = vadd.f32 %v118, %v119
    %v121 = vsel %vm83, %v82, 0.0
    %v122 = vrot.slane %v121, 4
    %v123 = vadd.f32 %v121, %v122
    %v124 = vrot.slane %v123, 2
    %v125 = vadd.f32 %v123, %v124
    %v126 = vrot.slane %v125, 1
    %v127 = vadd.f32 %v125, %v126
    %v128 = vmul.f32 %v120, 0.125
    %v129 = vmul.f32 %v127, 0.125
    %v130 = vsel %vm83, %v81, -inf
    %v131 = vrot.slane %v130, 4
    %v132 = vmax.f32 %v130, %v131
    %v133 = vrot.slane %v132, 2
    %v134 = vmax.f32 %v132, %v133
    %v135 = vrot.slane %v134, 1
    %v136 = vmax.f32 %v134, %v135
    %v137 = vsel %vm83, %v82, -inf
    %v138 = vrot.slane %v137, 4
    %v139 = vmax.f32 %v137, %v138
    %v140 = vrot.slane %v139, 2
    %v141 = vmax.f32 %v139, %v140
    %v142 = vrot.slane %v141, 1
    %v143 = vmax.f32 %v141, %v142
    %v144 = vld [vmem:[#allocation7] sm:$0xff]
    %v145 = vld [vmem:[#allocation7 + $0x8] sm:$0xff]
    %v146 = vld [vmem:[#allocation7 + $0x10] sm:$0xff]
    %v147 = vld [vmem:[#allocation7 + $0x18] sm:$0xff]
    %s148 = scalar_lea.vmem [#allocation7], 32
    %v149 = vld [vmem:[%s148] sm:$0xff]
    %v150 = vld [vmem:[%s148 + $0x8] sm:$0xff]
    %v151 = vld [vmem:[%s148 + $0x10] sm:$0xff]
    %v152 = vld [vmem:[%s148 + $0x18] sm:$0xff]
    %vm155 = vcmask 1041409
    %v156 = vsel %vm155, %v113, %v106
    %v157 = vsel %vm83, %v156, 0
    %159 = vmatprep.subr.mxu0 0.0
    %160 = vmatpush1.msra.mxu0 0.0
    %161 = vmatprep.subr.mxu0 0.0
    %162 = vmatpush1.msra.mxu0 0.0
    %163 = vmatprep.subr.mxu0 0.0
    %164 = vmatpush1.msra.mxu0 0.0
    %165 = vmatprep.subr.mxu0 0.0
    %166 = vmatpush1.msra.mxu0 0.0
    %167 = vmatprep.subr.mxu0 0.0
    %168 = vmatpush1.msra.mxu0 0.0
    %169 = vmatprep.subr.mxu0 0.0
    %170 = vmatpush1.msra.mxu0 0.0
    %171 = vmatprep.subr.mxu0 0.0
    %172 = vmatpush1.msra.mxu0 0.0
    %173 = vmatprep.subr.mxu0 0.0
    %174 = vmatpush1.msra.mxu0 0.0
    %175 = vmatprep.subr.mxu0 0.0
    %176 = vmatpush1.msra.mxu0 0.0
    %177 = vmatprep.subr.mxu0 0.0
    %178 = vmatpush1.msra.mxu0 0.0
    %179 = vmatprep.subr.mxu0 0.0
    %180 = vmatpush1.msra.mxu0 0.0
    %181 = vmatprep.subr.mxu0 0.0
    %182 = vmatpush1.msra.mxu0 0.0
    %183 = vmatprep.subr.mxu0 0.0
    %184 = vmatpush1.msra.mxu0 %v152
    %185 = vmatprep.subr.mxu0 0.0
    %186 = vmatpush1.msra.mxu0 %v151
    %187 = vmatprep.subr.mxu0 0.0
    %188 = vmatpush1.msra.mxu0 %v150
    %189 = vmatprep.subr.mxu0 0.0
    %190 = vmatpush1.msra.mxu0 %v149
    %191 = vmatprep.subr.mxu0 0.0
    %192 = vmatpush2.msra.mxu0 0.0
    %193 = vmatprep.subr.mxu0 0.0
    %194 = vmatpush2.msra.mxu0 0.0
    %195 = vmatprep.subr.mxu0 0.0
    %196 = vmatpush2.msra.mxu0 0.0
    %197 = vmatprep.subr.mxu0 0.0
    %198 = vmatpush2.msra.mxu0 0.0
    %199 = vmatprep.subr.mxu0 0.0
    %200 = vmatpush2.msra.mxu0 0.0
    %201 = vmatprep.subr.mxu0 0.0
    %202 = vmatpush2.msra.mxu0 0.0
    %203 = vmatprep.subr.mxu0 0.0
    %204 = vmatpush2.msra.mxu0 0.0
    %205 = vmatprep.subr.mxu0 0.0
    %206 = vmatpush2.msra.mxu0 0.0
    %207 = vmatprep.subr.mxu0 0.0
    %208 = vmatpush2.msra.mxu0 0.0
    %209 = vmatprep.subr.mxu0 0.0
    %210 = vmatpush2.msra.mxu0 0.0
    %211 = vmatprep.subr.mxu0 0.0
    %212 = vmatpush2.msra.mxu0 0.0
    %213 = vmatprep.subr.mxu0 0.0
    %214 = vmatpush2.msra.mxu0 0.0
    %215 = vmatprep.subr.mxu0 0.0
    %216 = vmatpush2.msra.mxu0 0.0
    %217 = vmatprep.subr.mxu0 0.0
    %218 = vmatpush2.msra.mxu0 0.0
    %219 = vmatprep.subr.mxu0 0.0
    %220 = vmatpush2.msra.mxu0 0.0
    %221 = vmatprep.subr.mxu0 0.0
    %222 = vmatpush2.msra.mxu0 0.0
    %223 = vmatprep.mubr.f32.mxu0 0.0
    %224 = vmatmul.mubr.f32.gmra.mxu0 %v157
    %v225 = vpop.f32.mrf.mxu0
    %v226 = vadd.f32 0.0, %v225
    %v227 = vpop.f32.mrf.mxu0
    %228 = vdwg.mxu0
    %v231 = vsel %vm155, %v99, %v98
    %v232 = vsel %vm83, %v231, 0
    %234 = vmatprep.subr.mxu0 0.0
    %235 = vmatpush1.msra.mxu0 0.0
    %236 = vmatprep.subr.mxu0 0.0
    %237 = vmatpush1.msra.mxu0 0.0
    %238 = vmatprep.subr.mxu0 0.0
    %239 = vmatpush1.msra.mxu0 0.0
    %240 = vmatprep.subr.mxu0 0.0
    %241 = vmatpush1.msra.mxu0 0.0
    %242 = vmatprep.subr.mxu0 0.0
    %243 = vmatpush1.msra.mxu0 0.0
    %244 = vmatprep.subr.mxu0 0.0
    %245 = vmatpush1.msra.mxu0 0.0
    %246 = vmatprep.subr.mxu0 0.0
    %247 = vmatpush1.msra.mxu0 0.0
    %248 = vmatprep.subr.mxu0 0.0
    %249 = vmatpush1.msra.mxu0 0.0
    %250 = vmatprep.subr.mxu0 0.0
    %251 = vmatpush1.msra.mxu0 0.0
    %252 = vmatprep.subr.mxu0 0.0
    %253 = vmatpush1.msra.mxu0 0.0
    %254 = vmatprep.subr.mxu0 0.0
    %255 = vmatpush1.msra.mxu0 0.0
    %256 = vmatprep.subr.mxu0 0.0
    %257 = vmatpush1.msra.mxu0 0.0
    %258 = vmatprep.subr.mxu0 0.0
    %259 = vmatpush1.msra.mxu0 %v147
    %260 = vmatprep.subr.mxu0 0.0
    %261 = vmatpush1.msra.mxu0 %v146
    %262 = vmatprep.subr.mxu0 0.0
    %263 = vmatpush1.msra.mxu0 %v145
    %264 = vmatprep.subr.mxu0 0.0
    %265 = vmatpush1.msra.mxu0 %v144
    %266 = vmatprep.subr.mxu0 0.0
    %267 = vmatpush2.msra.mxu0 0.0
    %268 = vmatprep.subr.mxu0 0.0
    %269 = vmatpush2.msra.mxu0 0.0
    %270 = vmatprep.subr.mxu0 0.0
    %271 = vmatpush2.msra.mxu0 0.0
    %272 = vmatprep.subr.mxu0 0.0
    %273 = vmatpush2.msra.mxu0 0.0
    %274 = vmatprep.subr.mxu0 0.0
    %275 = vmatpush2.msra.mxu0 0.0
    %276 = vmatprep.subr.mxu0 0.0
    %277 = vmatpush2.msra.mxu0 0.0
    %278 = vmatprep.subr.mxu0 0.0
    %279 = vmatpush2.msra.mxu0 0.0
    %280 = vmatprep.subr.mxu0 0.0
    %281 = vmatpush2.msra.mxu0 0.0
    %282 = vmatprep.subr.mxu0 0.0
    %283 = vmatpush2.msra.mxu0 0.0
    %284 = vmatprep.subr.mxu0 0.0
    %285 = vmatpush2.msra.mxu0 0.0
    %286 = vmatprep.subr.mxu0 0.0
    %287 = vmatpush2.msra.mxu0 0.0
    %288 = vmatprep.subr.mxu0 0.0
    %289 = vmatpush2.msra.mxu0 0.0
    %290 = vmatprep.subr.mxu0 0.0
    %291 = vmatpush2.msra.mxu0 0.0
    %292 = vmatprep.subr.mxu0 0.0
    %293 = vmatpush2.msra.mxu0 0.0
    %294 = vmatprep.subr.mxu0 0.0
    %295 = vmatpush2.msra.mxu0 0.0
    %296 = vmatprep.subr.mxu0 0.0
    %297 = vmatpush2.msra.mxu0 0.0
    %298 = vmatprep.mubr.f32.mxu0 0.0
    %299 = vmatmul.mubr.f32.gmra.mxu0 %v232
    %v300 = vpop.f32.mrf.mxu0
    %v301 = vadd.f32 %v226, %v300
    %v302 = vpop.f32.mrf.mxu0
    %303 = vdwg.mxu0
    %s304 = scalar_lea.vmem [#allocation7], 64
    %v305 = vld [vmem:[%s304] sm:$0xff]
    %v306 = vld [vmem:[%s304 + $0x8] sm:$0xff]
    %v307 = vld [vmem:[%s304 + $0x10] sm:$0xff]
    %v308 = vld [vmem:[%s304 + $0x18] sm:$0xff]
    %v311 = vsel %vm155, %v129, %v128
    %v312 = vsel %vm83, %v311, 0
    %314 = vmatprep.subr.mxu0 0.0
    %315 = vmatpush1.msra.mxu0 0.0
    %316 = vmatprep.subr.mxu0 0.0
    %317 = vmatpush1.msra.mxu0 0.0
    %318 = vmatprep.subr.mxu0 0.0
    %319 = vmatpush1.msra.mxu0 0.0
    %320 = vmatprep.subr.mxu0 0.0
    %321 = vmatpush1.msra.mxu0 0.0
    %322 = vmatprep.subr.mxu0 0.0
    %323 = vmatpush1.msra.mxu0 0.0
    %324 = vmatprep.subr.mxu0 0.0
    %325 = vmatpush1.msra.mxu0 0.0
    %326 = vmatprep.subr.mxu0 0.0
    %327 = vmatpush1.msra.mxu0 0.0
    %328 = vmatprep.subr.mxu0 0.0
    %329 = vmatpush1.msra.mxu0 0.0
    %330 = vmatprep.subr.mxu0 0.0
    %331 = vmatpush1.msra.mxu0 0.0
    %332 = vmatprep.subr.mxu0 0.0
    %333 = vmatpush1.msra.mxu0 0.0
    %334 = vmatprep.subr.mxu0 0.0
    %335 = vmatpush1.msra.mxu0 0.0
    %336 = vmatprep.subr.mxu0 0.0
    %337 = vmatpush1.msra.mxu0 0.0
    %338 = vmatprep.subr.mxu0 0.0
    %339 = vmatpush1.msra.mxu0 %v308
    %340 = vmatprep.subr.mxu0 0.0
    %341 = vmatpush1.msra.mxu0 %v307
    %342 = vmatprep.subr.mxu0 0.0
    %343 = vmatpush1.msra.mxu0 %v306
    %344 = vmatprep.subr.mxu0 0.0
    %345 = vmatpush1.msra.mxu0 %v305
    %346 = vmatprep.subr.mxu0 0.0
    %347 = vmatpush2.msra.mxu0 0.0
    %348 = vmatprep.subr.mxu0 0.0
    %349 = vmatpush2.msra.mxu0 0.0
    %350 = vmatprep.subr.mxu0 0.0
    %351 = vmatpush2.msra.mxu0 0.0
    %352 = vmatprep.subr.mxu0 0.0
    %353 = vmatpush2.msra.mxu0 0.0
    %354 = vmatprep.subr.mxu0 0.0
    %355 = vmatpush2.msra.mxu0 0.0
    %356 = vmatprep.subr.mxu0 0.0
    %357 = vmatpush2.msra.mxu0 0.0
    %358 = vmatprep.subr.mxu0 0.0
    %359 = vmatpush2.msra.mxu0 0.0
    %360 = vmatprep.subr.mxu0 0.0
    %361 = vmatpush2.msra.mxu0 0.0
    %362 = vmatprep.subr.mxu0 0.0
    %363 = vmatpush2.msra.mxu0 0.0
    %364 = vmatprep.subr.mxu0 0.0
    %365 = vmatpush2.msra.mxu0 0.0
    %366 = vmatprep.subr.mxu0 0.0
    %367 = vmatpush2.msra.mxu0 0.0
    %368 = vmatprep.subr.mxu0 0.0
    %369 = vmatpush2.msra.mxu0 0.0
    %370 = vmatprep.subr.mxu0 0.0
    %371 = vmatpush2.msra.mxu0 0.0
    %372 = vmatprep.subr.mxu0 0.0
    %373 = vmatpush2.msra.mxu0 0.0
    %374 = vmatprep.subr.mxu0 0.0
    %375 = vmatpush2.msra.mxu0 0.0
    %376 = vmatprep.subr.mxu0 0.0
    %377 = vmatpush2.msra.mxu0 0.0
    %378 = vmatprep.mubr.f32.mxu0 0.0
    %379 = vmatmul.mubr.f32.gmra.mxu0 %v312
    %v380 = vpop.f32.mrf.mxu0
    %v381 = vadd.f32 0.0, %v380
    %v382 = vpop.f32.mrf.mxu0
    %383 = vdwg.mxu0
    %v384 = vadd.f32 %v301, %v381
    %s385 = scalar_lea.vmem [#allocation7], 96
    %v386 = vld [vmem:[%s385] sm:$0xff]
    %v387 = vld [vmem:[%s385 + $0x8] sm:$0xff]
    %v388 = vld [vmem:[%s385 + $0x10] sm:$0xff]
    %v389 = vld [vmem:[%s385 + $0x18] sm:$0xff]
    %v392 = vsel %vm155, %v143, %v136
    %v393 = vsel %vm83, %v392, 0
    %395 = vmatprep.subr.mxu0 0.0
    %396 = vmatpush1.msra.mxu0 0.0
    %397 = vmatprep.subr.mxu0 0.0
    %398 = vmatpush1.msra.mxu0 0.0
    %399 = vmatprep.subr.mxu0 0.0
    %400 = vmatpush1.msra.mxu0 0.0
    %401 = vmatprep.subr.mxu0 0.0
    %402 = vmatpush1.msra.mxu0 0.0
    %403 = vmatprep.subr.mxu0 0.0
    %404 = vmatpush1.msra.mxu0 0.0
    %405 = vmatprep.subr.mxu0 0.0
    %406 = vmatpush1.msra.mxu0 0.0
    %407 = vmatprep.subr.mxu0 0.0
    %408 = vmatpush1.msra.mxu0 0.0
    %409 = vmatprep.subr.mxu0 0.0
    %410 = vmatpush1.msra.mxu0 0.0
    %411 = vmatprep.subr.mxu0 0.0
    %412 = vmatpush1.msra.mxu0 0.0
    %413 = vmatprep.subr.mxu0 0.0
    %414 = vmatpush1.msra.mxu0 0.0
    %415 = vmatprep.subr.mxu0 0.0
    %416 = vmatpush1.msra.mxu0 0.0
    %417 = vmatprep.subr.mxu0 0.0
    %418 = vmatpush1.msra.mxu0 0.0
    %419 = vmatprep.subr.mxu0 0.0
    %420 = vmatpush1.msra.mxu0 %v389
    %421 = vmatprep.subr.mxu0 0.0
    %422 = vmatpush1.msra.mxu0 %v388
    %423 = vmatprep.subr.mxu0 0.0
    %424 = vmatpush1.msra.mxu0 %v387
    %425 = vmatprep.subr.mxu0 0.0
    %426 = vmatpush1.msra.mxu0 %v386
    %427 = vmatprep.subr.mxu0 0.0
    %428 = vmatpush2.msra.mxu0 0.0
    %429 = vmatprep.subr.mxu0 0.0
    %430 = vmatpush2.msra.mxu0 0.0
    %431 = vmatprep.subr.mxu0 0.0
    %432 = vmatpush2.msra.mxu0 0.0
    %433 = vmatprep.subr.mxu0 0.0
    %434 = vmatpush2.msra.mxu0 0.0
    %435 = vmatprep.subr.mxu0 0.0
    %436 = vmatpush2.msra.mxu0 0.0
    %437 = vmatprep.subr.mxu0 0.0
    %438 = vmatpush2.msra.mxu0 0.0
    %439 = vmatprep.subr.mxu0 0.0
    %440 = vmatpush2.msra.mxu0 0.0
    %441 = vmatprep.subr.mxu0 0.0
    %442 = vmatpush2.msra.mxu0 0.0
    %443 = vmatprep.subr.mxu0 0.0
    %444 = vmatpush2.msra.mxu0 0.0
    %445 = vmatprep.subr.mxu0 0.0
    %446 = vmatpush2.msra.mxu0 0.0
    %447 = vmatprep.subr.mxu0 0.0
    %448 = vmatpush2.msra.mxu0 0.0
    %449 = vmatprep.subr.mxu0 0.0
    %450 = vmatpush2.msra.mxu0 0.0
    %451 = vmatprep.subr.mxu0 0.0
    %452 = vmatpush2.msra.mxu0 0.0
    %453 = vmatprep.subr.mxu0 0.0
    %454 = vmatpush2.msra.mxu0 0.0
    %455 = vmatprep.subr.mxu0 0.0
    %456 = vmatpush2.msra.mxu0 0.0
    %457 = vmatprep.subr.mxu0 0.0
    %458 = vmatpush2.msra.mxu0 0.0
    %459 = vmatprep.mubr.f32.mxu0 0.0
    %460 = vmatmul.mubr.f32.gmra.mxu0 %v393
    %v461 = vpop.f32.mrf.mxu0
    %v462 = vadd.f32 0.0, %v461
    %v463 = vpop.f32.mrf.mxu0
    %464 = vdwg.mxu0
    %v465 = vadd.f32 %v384, %v462
    %v466 = vld [vmem:[%s3] sm:$0x1]
    %v468 = vlaneseq
    %v469 = vshrl.u32 %v468, 7
    %v470 = vsub.s32 0, %v469
    %v471 = vrot.slane %v466, %v470
    %v473 = vadd.f32 %v465, %v471
    %v474 = vtanh.pop %v473
    %v475 = vld [vmem:[#allocation8] sm:$0xff]
    %v476 = vld [vmem:[#allocation8 + $0x8] sm:$0xff]
    %v477 = vld [vmem:[#allocation8 + $0x10] sm:$0xff]
    %v478 = vld [vmem:[#allocation8 + $0x18] sm:$0xff]
    %v479 = vld [vmem:[%s5] sm:$0x1]
    %v481 = vlaneseq
    %v482 = vshrl.u32 %v481, 7
    %v483 = vsub.s32 0, %v482
    %v484 = vrot.slane %v479, %v483
    %v487 = vsel %vm83, %v474, 0
    %489 = vmatprep.subr.mxu0 0.0
    %490 = vmatpush1.msra.mxu0 0.0
    %491 = vmatprep.subr.mxu0 0.0
    %492 = vmatpush1.msra.mxu0 0.0
    %493 = vmatprep.subr.mxu0 0.0
    %494 = vmatpush1.msra.mxu0 0.0
    %495 = vmatprep.subr.mxu0 0.0
    %496 = vmatpush1.msra.mxu0 0.0
    %497 = vmatprep.subr.mxu0 0.0
    %498 = vmatpush1.msra.mxu0 0.0
    %499 = vmatprep.subr.mxu0 0.0
    %500 = vmatpush1.msra.mxu0 0.0
    %501 = vmatprep.subr.mxu0 0.0
    %502 = vmatpush1.msra.mxu0 0.0
    %503 = vmatprep.subr.mxu0 0.0
    %504 = vmatpush1.msra.mxu0 0.0
    %505 = vmatprep.subr.mxu0 0.0
    %506 = vmatpush1.msra.mxu0 0.0
    %507 = vmatprep.subr.mxu0 0.0
    %508 = vmatpush1.msra.mxu0 0.0
    %509 = vmatprep.subr.mxu0 0.0
    %510 = vmatpush1.msra.mxu0 0.0
    %511 = vmatprep.subr.mxu0 0.0
    %512 = vmatpush1.msra.mxu0 0.0
    %513 = vmatprep.subr.mxu0 0.0
    %514 = vmatpush1.msra.mxu0 %v478
    %515 = vmatprep.subr.mxu0 0.0
    %516 = vmatpush1.msra.mxu0 %v477
    %517 = vmatprep.subr.mxu0 0.0
    %518 = vmatpush1.msra.mxu0 %v476
    %519 = vmatprep.subr.mxu0 0.0
    %520 = vmatpush1.msra.mxu0 %v475
    %521 = vmatprep.subr.mxu0 0.0
    %522 = vmatpush2.msra.mxu0 0.0
    %523 = vmatprep.subr.mxu0 0.0
    %524 = vmatpush2.msra.mxu0 0.0
    %525 = vmatprep.subr.mxu0 0.0
    %526 = vmatpush2.msra.mxu0 0.0
    %527 = vmatprep.subr.mxu0 0.0
    %528 = vmatpush2.msra.mxu0 0.0
    %529 = vmatprep.subr.mxu0 0.0
    %530 = vmatpush2.msra.mxu0 0.0
    %531 = vmatprep.subr.mxu0 0.0
    %532 = vmatpush2.msra.mxu0 0.0
    %533 = vmatprep.subr.mxu0 0.0
    %534 = vmatpush2.msra.mxu0 0.0
    %535 = vmatprep.subr.mxu0 0.0
    %536 = vmatpush2.msra.mxu0 0.0
    %537 = vmatprep.subr.mxu0 0.0
    %538 = vmatpush2.msra.mxu0 0.0
    %539 = vmatprep.subr.mxu0 0.0
    %540 = vmatpush2.msra.mxu0 0.0
    %541 = vmatprep.subr.mxu0 0.0
    %542 = vmatpush2.msra.mxu0 0.0
    %543 = vmatprep.subr.mxu0 0.0
    %544 = vmatpush2.msra.mxu0 0.0
    %545 = vmatprep.subr.mxu0 0.0
    %546 = vmatpush2.msra.mxu0 0.0
    %547 = vmatprep.subr.mxu0 0.0
    %548 = vmatpush2.msra.mxu0 0.0
    %549 = vmatprep.subr.mxu0 0.0
    %550 = vmatpush2.msra.mxu0 0.0
    %551 = vmatprep.subr.mxu0 0.0
    %552 = vmatpush2.msra.mxu0 0.0
    %553 = vmatprep.mubr.f32.mxu0 0.0
    %554 = vmatmul.mubr.f32.gmra.mxu0 %v487
    %v555 = vpop.f32.mrf.mxu0
    %v556 = vadd.f32 %v484, %v555
    %v557 = vpop.f32.mrf.mxu0
    %558 = vdwg.mxu0
    %559 = vst [vmem:[#allocation10] sm:$0x3] %v556
    // Predicated region
    $region42: #{tpu_custom_call.1} parent=1 // pred_check
      _
    $region43: #{tpu_custom_call.1} parent=1 // pred_check_branch
      %561 = sbr.rel (0) target = $region45
    $region44: #{tpu_custom_call.1} parent=1 // pred_region
      %s563 = ssub.s32 32, 32
      %564 = vsyncadd [#allocation4], %s563
      %s566 = sshll.u32 [#allocation10], 4
      %s567 = int_to_ptr.vmem [resolvable:$true] %s566
      %569 = dma.vmem_to_hbm [thread:$0]  %s567, 32, %s6, [#allocation4]
    $region45: #{tpu_custom_call.1} parent=1 // pred_fallthru
      _
    // Predicated region
    $region46: #{tpu_custom_call.1} parent=1 // pred_check
      _
    $region47: #{tpu_custom_call.1} parent=1 // pred_check_branch
      %571 = sbr.rel (0) target = $region49
    $region48: #{tpu_custom_call.1} parent=1 // pred_region
      %572 = dma.done [#allocation4], 32
    $region49: #{tpu_custom_call.1} parent=1 // pred_fallthru
      _
    %573 = vsyncpa [#allocation3], 1
    %574 = vsyncpa [#allocation6], 1
    %575 = vsyncpa [#allocation9], 1
    %576 = vsyncpa [#allocation4], 1

</llo_original>
